<compile_context>
chip_gen: v5e
topology: v5e:2x2
jax: 0.10.0
libtpu: 0.0.40
codegen_flags: <defaults>
</compile_context>

<pallas_src>
import math
from dataclasses import dataclass, field
from functools import partial
from typing import List

import numpy as np
import jax
import jax.numpy as jnp
from jax import lax
from jax.experimental import pallas as pl
from jax.experimental.pallas import tpu as pltpu


# ----------------------------- meta (config) ---------------------------------
@dataclass
class Meta:
    name: str = "cif"
    dataset: str = "synthetic"
    n_fields: int = 4
    n_confidences: int = 1
    n_vectors: int = 1
    n_scales: int = 1
    vector_offsets: List[bool] = field(default_factory=lambda: [True])
    upsample_stride: int = 1  # PixelShuffle path not exercised (stride == 1)


# ------------------------------ Pallas kernel --------------------------------
def cf4_kernel(x_ref, w_ref, cp_ref, o_ref, *, img_w, tile_hw):
    # x_ref:  (1, Cin, T)   channel-major activations, pixels on lanes
    # w_ref:  (Cout, Cin)   1x1 conv weight (PyTorch layout, no transpose needed)
    # cp_ref: (Cout, 8)     per-channel table: [bias, offx, offy, sigmoid, softplus, 0,0,0]
    # o_ref:  (1, Cout, T)
    x = x_ref[0]                                   # (Cin, T)
    w = w_ref[...]                                 # (Cout, Cin)
    acc = jnp.dot(w, x, preferred_element_type=jnp.float32)   # (Cout, T) on MXU

    bias = cp_ref[:, 0:1]
    offx = cp_ref[:, 1:2]
    offy = cp_ref[:, 2:3]
    sigm = cp_ref[:, 3:4]
    splm = cp_ref[:, 4:5]

    acc = acc + bias
    y = jnp.where(sigm > 0.0, jax.nn.sigmoid(acc), acc)        # confidences
    y = jnp.where(splm > 0.0, jnp.logaddexp(0.0, acc), y)      # scales (softplus)

    # In-kernel index field: flat pixel id -> (col=x, row=y).
    # Float path with a one-step correction is exact for H*W < 2**24 pixels.
    base = (pl.program_id(1) * tile_hw).astype(jnp.float32)
    lane = lax.broadcasted_iota(jnp.int32, (1, tile_hw), 1).astype(jnp.float32)
    p = base + lane                                             # (1, T)
    wf = float(img_w)
    row = jnp.floor(p * (1.0 / wf))
    col = p - row * wf
    row = jnp.where(col < 0.0, row - 1.0, row)
    col = jnp.where(col < 0.0, col + wf, col)
    row = jnp.where(col >= wf, row + 1.0, row)
    col = jnp.where(col >= wf, col - wf, col)

    y = y + offx * col + offy * row                             # regression offsets
    o_ref[0] = y.astype(o_ref.dtype)


# ------------------------------ tiling helper ---------------------------------
def _round_up(x, m):
    return (x + m - 1) // m * m


def _choose_tile_hw(hw, target):
    """Pick a lane-aligned pixel tile; pad H*W minimally if no good divisor."""
    target = max(128, _round_up(target, 128))
    hw128 = _round_up(hw, 128)
    if hw128 <= target:
        return hw128, hw128
    n = hw128 // 128
    best = max(d for d in range(1, n + 1) if n % d == 0 and 128 * d <= target)
    tile = 128 * best
    if tile >= 512:
        return tile, hw128
    # no decent divisor of the 128-padded length: pad to a multiple of the target
    return target, _round_up(hw, target)


# ------------------------------ wrapper --------------------------------------
def composite_field4_forward(x_nchw, weight, bias, meta: Meta, *,
                             tile_hw_target=2048, use_bf16=False):
    """x_nchw: (B, Cin, H, W) float32. weight: (Cout, Cin) 1x1 conv weight.
    Returns (B, n_fields, n_components, H, W) float32 (eval mode)."""
    B, Cin, H, W = x_nchw.shape
    n_components = 1 + meta.n_confidences + meta.n_vectors * 2 + meta.n_scales
    Cout = meta.n_fields * n_components
    assert weight.shape == (Cout, Cin)
    # TODO(synk): PixelShuffle/crop path (upsample_stride > 1) is pure data movement
    # and would be handled as JAX-glue reshape/transpose around this kernel.
    assert meta.upsample_stride == 1

    HW = H * W
    tile_hw, hw_pad = _choose_tile_hw(HW, tile_hw_target)
    n_hw_tiles = hw_pad // tile_hw

    # channel-major activations: free view of contiguous NCHW (no HBM transpose)
    x3 = x_nchw.reshape(B, Cin, HW)
    if hw_pad != HW:
        x3 = jnp.pad(x3, ((0, 0), (0, 0), (0, hw_pad - HW)))
    w2 = weight
    if use_bf16:
        x3 = x3.astype(jnp.bfloat16)
        w2 = w2.astype(jnp.bfloat16)

    # per-output-channel parameter table: [bias, offx, offy, sigmoid, softplus, 0,0,0]
    masks = np.zeros((Cout, 8), np.float32)
    first_reg = 1 + meta.n_confidences
    first_scale = 1 + meta.n_confidences + meta.n_vectors * 2
    for f in range(meta.n_fields):
        base = f * n_components
        for k in range(1, 1 + meta.n_confidences):
            masks[base + k, 3] = 1.0                       # sigmoid
        for i, do_offset in enumerate(meta.vector_offsets):
            if not do_offset:
                continue
            masks[base + first_reg + 2 * i, 1] = 1.0       # +col (x)
            masks[base + first_reg + 2 * i + 1, 2] = 1.0   # +row (y)
        for k in range(first_scale, first_scale + meta.n_scales):
            masks[base + k, 4] = 1.0                       # softplus
    cp = jnp.asarray(masks).at[:, 0].set(bias.astype(jnp.float32))

    cost = pl.CostEstimate(
        flops=2 * B * hw_pad * Cin * Cout,
        transcendentals=4 * B * hw_pad * Cout,
        bytes_accessed=4 * (B * hw_pad * (Cin + Cout) + Cout * Cin + Cout * 8),
    )

    grid = (B, n_hw_tiles)
    out3 = pl.pallas_call(
        partial(cf4_kernel, img_w=W, tile_hw=tile_hw),
        out_shape=jax.ShapeDtypeStruct((B, Cout, hw_pad), jnp.float32),
        grid_spec=pltpu.PrefetchScalarGridSpec(
            num_scalar_prefetch=0,
            grid=grid,
            in_specs=[
                pl.BlockSpec((1, Cin, tile_hw), lambda b, j: (b, 0, j)),  # x
                pl.BlockSpec((Cout, Cin), lambda b, j: (0, 0)),           # weight (resident)
                pl.BlockSpec((Cout, 8), lambda b, j: (0, 0)),             # channel params (resident)
            ],
            out_specs=pl.BlockSpec((1, Cout, tile_hw), lambda b, j: (b, 0, j)),
        ),
        compiler_params=pltpu.CompilerParams(
            dimension_semantics=("parallel", "parallel")),
        cost_estimate=cost,
    )(x3, w2, cp)

    if hw_pad != HW:
        out3 = out3[:, :, :HW]
    # already in PyTorch channel order: just view as (B, n_fields, n_components, H, W)
    return out3.reshape(B, meta.n_fields, n_components, H, W)


# --------------------------- pure-JAX reference -------------------------------
def composite_field4_reference(x_nchw, weight, bias, meta: Meta):
    B, Cin, H, W = x_nchw.shape
    n_components = 1 + meta.n_confidences + meta.n_vectors * 2 + meta.n_scales
    # 1x1 conv
    y = jnp.einsum("bchw,oc->bohw", x_nchw, weight) + bias[None, :, None, None]
    y = y.reshape(B, meta.n_fields, n_components, H, W)
    # sigmoid confidences
    conf = jax.nn.sigmoid(y[:, :, 1:1 + meta.n_confidences])
    y = y.at[:, :, 1:1 + meta.n_confidences].set(conf)
    # regression offsets
    first_reg = 1 + meta.n_confidences
    xs = jnp.arange(W, dtype=jnp.float32)[None, :]  # x = column
    ys = jnp.arange(H, dtype=jnp.float32)[:, None]  # y = row
    index_field = jnp.stack([jnp.broadcast_to(xs, (H, W)),
                             jnp.broadcast_to(ys, (H, W))], axis=0)  # (2, H, W)
    for i, do_offset in enumerate(meta.vector_offsets):
        if not do_offset:
            continue
        sl = slice(first_reg + 2 * i, first_reg + 2 * (i + 1))
        y = y.at[:, :, sl].add(index_field[None, None])
    # softplus scales
    first_scale = 1 + meta.n_confidences + meta.n_vectors * 2
    sc = jnp.logaddexp(0.0, y[:, :, first_scale:first_scale + meta.n_scales])
    y = y.at[:, :, first_scale:first_scale + meta.n_scales].set(sc)
    return y


# ------------------------------------ main ------------------------------------
if __name__ == "__main__":
    meta = Meta()
    B, Cin, H, W = 2, 32, 16, 16
    n_components = 1 + meta.n_confidences + meta.n_vectors * 2 + meta.n_scales
    Cout = meta.n_fields * n_components * meta.upsample_stride ** 2

    key = jax.random.PRNGKey(0)
    kx, kw, kb = jax.random.split(key, 3)
    x = jax.random.normal(kx, (B, Cin, H, W), dtype=jnp.float32)

    # deterministic conv parameter init (kaiming-uniform-like bounds of Conv2d)
    fan_in = Cin * 1 * 1
    bound = 1.0 / math.sqrt(fan_in)
    weight = jax.random.uniform(kw, (Cout, Cin), minval=-bound, maxval=bound,
                                dtype=jnp.float32)
    bias = jax.random.uniform(kb, (Cout,), minval=-bound, maxval=bound,
                              dtype=jnp.float32)

    out = composite_field4_forward(x, weight, bias, meta)
    out = jax.block_until_ready(out)

    ref = jax.block_until_ready(composite_field4_reference(x, weight, bias, meta))
    assert out.shape == (B, meta.n_fields, n_components, H, W)
    np.testing.assert_allclose(np.asarray(out), np.asarray(ref), rtol=1e-5, atol=1e-5)

    print("KERNEL_OK")
</pallas_src>

<mosaic_0001>
module attributes {stable_mosaic.version = 11 : i64} {
  func.func @cf4_kernel(%arg0: i32, %arg1: i32, %arg2: memref<1x32x256xf32, #tpu.memory_space<vmem>>, %arg3: memref<20x32xf32, #tpu.memory_space<vmem>>, %arg4: memref<20x8xf32, #tpu.memory_space<vmem>>, %arg5: memref<1x20x256xf32, #tpu.memory_space<vmem>>) attributes {dimension_semantics = [#tpu.dimension_semantics<parallel>, #tpu.dimension_semantics<parallel>], iteration_bounds = array<i64: 2, 1>, scalar_prefetch = 0 : i64, scratch_operands = 0 : i64, tpu.core_type = #tpu.core_type<tc>, window_params = [{transform_indices = @transform_0, window_bounds = array<i64: 1, 32, 256>}, {pipeline_mode = #tpu.pipeline_mode<synchronous>, transform_indices = @transform_1, window_bounds = array<i64: 20, 32>}, {pipeline_mode = #tpu.pipeline_mode<synchronous>, transform_indices = @transform_2, window_bounds = array<i64: 20, 8>}, {transform_indices = @transform_3, window_bounds = array<i64: 1, 20, 256>}]} {
    %c0 = arith.constant 0 : index
    %c0_0 = arith.constant 0 : index
    %c0_1 = arith.constant 0 : index
    %0 = vector.load %arg2[%c0, %c0_0, %c0_1] : memref<1x32x256xf32, #tpu.memory_space<vmem>>, vector<1x32x256xf32>
    %1 = vector.shape_cast %0 : vector<1x32x256xf32> to vector<32x256xf32>
    %c0_2 = arith.constant 0 : index
    %c0_3 = arith.constant 0 : index
    %2 = vector.load %arg3[%c0_2, %c0_3] : memref<20x32xf32, #tpu.memory_space<vmem>>, vector<20x32xf32>
    %cst = arith.constant dense<0.000000e+00> : vector<20x256xf32>
    %3 = tpu.matmul %2, %1, %cst {dimension_numbers = #tpu.dot_dimension_numbers<[1], [0], [0], [1], [0, 0, 1, 1], [], []>} : vector<20x32xf32>, vector<32x256xf32>, vector<20x256xf32> -> vector<20x256xf32>
    %c0_4 = arith.constant 0 : index
    %c0_5 = arith.constant 0 : index
    %4 = vector.load %arg4[%c0_4, %c0_5] : memref<20x8xf32, #tpu.memory_space<vmem>>, vector<20x1xf32>
    %c0_6 = arith.constant 0 : index
    %c1 = arith.constant 1 : index
    %5 = vector.load %arg4[%c0_6, %c1] : memref<20x8xf32, #tpu.memory_space<vmem>>, vector<20x1xf32>
    %c0_7 = arith.constant 0 : index
    %c2 = arith.constant 2 : index
    %6 = vector.load %arg4[%c0_7, %c2] : memref<20x8xf32, #tpu.memory_space<vmem>>, vector<20x1xf32>
    %c0_8 = arith.constant 0 : index
    %c3 = arith.constant 3 : index
    %7 = vector.load %arg4[%c0_8, %c3] : memref<20x8xf32, #tpu.memory_space<vmem>>, vector<20x1xf32>
    %c0_9 = arith.constant 0 : index
    %c4 = arith.constant 4 : index
    %8 = vector.load %arg4[%c0_9, %c4] : memref<20x8xf32, #tpu.memory_space<vmem>>, vector<20x1xf32>
    %9 = vector.broadcast %4 : vector<20x1xf32> to vector<20x256xf32>
    %10 = arith.addf %3, %9 : vector<20x256xf32>
    %cst_10 = arith.constant 0.000000e+00 : f32
    %11 = vector.broadcast %cst_10 : f32 to vector<20x1xf32>
    %12 = arith.cmpf ogt, %7, %11 : vector<20x1xf32>
    %13 = arith.negf %10 : vector<20x256xf32>
    %14 = math.exp %13 : vector<20x256xf32>
    %cst_11 = arith.constant 1.000000e+00 : f32
    %15 = vector.broadcast %cst_11 : f32 to vector<20x256xf32>
    %16 = arith.addf %15, %14 : vector<20x256xf32>
    %17 = arith.divf %15, %16 : vector<20x256xf32>
    %18 = vector.shape_cast %12 : vector<20x1xi1> to vector<20x1xi1>
    %19 = vector.broadcast %18 : vector<20x1xi1> to vector<20x256xi1>
    %20 = arith.select %19, %17, %10 : vector<20x256xi1>, vector<20x256xf32>
    %cst_12 = arith.constant 0.000000e+00 : f32
    %21 = vector.broadcast %cst_12 : f32 to vector<20x1xf32>
    %22 = arith.cmpf ogt, %8, %21 : vector<20x1xf32>
    %cst_13 = arith.constant 0.000000e+00 : f32
    %23 = vector.broadcast %cst_13 : f32 to vector<20x256xf32>
    %24 = arith.maximumf %23, %10 : vector<20x256xf32>
    %25 = vector.broadcast %cst_13 : f32 to vector<20x256xf32>
    %26 = arith.subf %25, %10 : vector<20x256xf32>
    %27 = arith.cmpf one, %26, %26 : vector<20x256xf32>
    %28 = vector.broadcast %cst_13 : f32 to vector<20x256xf32>
    %29 = arith.addf %28, %10 : vector<20x256xf32>
    %30 = math.absf %26 : vector<20x256xf32>
    %cst_14 = arith.constant 0.000000e+00 : f32
    %31 = vector.broadcast %cst_14 : f32 to vector<20x256xf32>
    %32 = arith.subf %31, %30 : vector<20x256xf32>
    %33 = math.exp %32 : vector<20x256xf32>
    %34 = math.log1p %33 : vector<20x256xf32>
    %35 = arith.addf %24, %34 : vector<20x256xf32>
    %36 = arith.select %27, %29, %35 : vector<20x256xi1>, vector<20x256xf32>
    %37 = vector.shape_cast %22 : vector<20x1xi1> to vector<20x1xi1>
    %38 = vector.broadcast %37 : vector<20x1xi1> to vector<20x256xi1>
    %39 = arith.select %38, %36, %20 : vector<20x256xi1>, vector<20x256xf32>
    %c256_i32 = arith.constant 256 : i32
    %40 = arith.muli %arg1, %c256_i32 : i32
    %41 = arith.sitofp %40 : i32 to f32
    %42 = tpu.iota {dimensions = array<i32: 1>} : vector<1x256xi32>
    %43 = arith.sitofp %42 : vector<1x256xi32> to vector<1x256xf32>
    %44 = vector.broadcast %41 : f32 to vector<1x256xf32>
    %45 = arith.addf %44, %43 : vector<1x256xf32>
    %cst_15 = arith.constant 6.250000e-02 : f32
    %46 = vector.broadcast %cst_15 : f32 to vector<1x256xf32>
    %47 = arith.mulf %45, %46 : vector<1x256xf32>
    %48 = math.floor %47 : vector<1x256xf32>
    %cst_16 = arith.constant 1.600000e+01 : f32
    %49 = vector.broadcast %cst_16 : f32 to vector<1x256xf32>
    %50 = arith.mulf %48, %49 : vector<1x256xf32>
    %51 = arith.subf %45, %50 : vector<1x256xf32>
    %cst_17 = arith.constant 0.000000e+00 : f32
    %52 = vector.broadcast %cst_17 : f32 to vector<1x256xf32>
    %53 = arith.cmpf olt, %51, %52 : vector<1x256xf32>
    %cst_18 = arith.constant 1.000000e+00 : f32
    %54 = vector.broadcast %cst_18 : f32 to vector<1x256xf32>
    %55 = arith.subf %48, %54 : vector<1x256xf32>
    %56 = arith.select %53, %55, %48 : vector<1x256xi1>, vector<1x256xf32>
    %cst_19 = arith.constant 0.000000e+00 : f32
    %57 = vector.broadcast %cst_19 : f32 to vector<1x256xf32>
    %58 = arith.cmpf olt, %51, %57 : vector<1x256xf32>
    %cst_20 = arith.constant 1.600000e+01 : f32
    %59 = vector.broadcast %cst_20 : f32 to vector<1x256xf32>
    %60 = arith.addf %51, %59 : vector<1x256xf32>
    %61 = arith.select %58, %60, %51 : vector<1x256xi1>, vector<1x256xf32>
    %cst_21 = arith.constant 1.600000e+01 : f32
    %62 = vector.broadcast %cst_21 : f32 to vector<1x256xf32>
    %63 = arith.cmpf oge, %61, %62 : vector<1x256xf32>
    %cst_22 = arith.constant 1.000000e+00 : f32
    %64 = vector.broadcast %cst_22 : f32 to vector<1x256xf32>
    %65 = arith.addf %56, %64 : vector<1x256xf32>
    %66 = arith.select %63, %65, %56 : vector<1x256xi1>, vector<1x256xf32>
    %cst_23 = arith.constant 1.600000e+01 : f32
    %67 = vector.broadcast %cst_23 : f32 to vector<1x256xf32>
    %68 = arith.cmpf oge, %61, %67 : vector<1x256xf32>
    %cst_24 = arith.constant 1.600000e+01 : f32
    %69 = vector.broadcast %cst_24 : f32 to vector<1x256xf32>
    %70 = arith.subf %61, %69 : vector<1x256xf32>
    %71 = arith.select %68, %70, %61 : vector<1x256xi1>, vector<1x256xf32>
    %72 = vector.broadcast %5 : vector<20x1xf32> to vector<20x256xf32>
    %73 = vector.broadcast %71 : vector<1x256xf32> to vector<20x256xf32>
    %74 = arith.mulf %72, %73 : vector<20x256xf32>
    %75 = arith.addf %39, %74 : vector<20x256xf32>
    %76 = vector.broadcast %6 : vector<20x1xf32> to vector<20x256xf32>
    %77 = vector.broadcast %66 : vector<1x256xf32> to vector<20x256xf32>
    %78 = arith.mulf %76, %77 : vector<20x256xf32>
    %79 = arith.addf %75, %78 : vector<20x256xf32>
    %c0_25 = arith.constant 0 : index
    %c0_26 = arith.constant 0 : index
    %c0_27 = arith.constant 0 : index
    %80 = vector.load %arg5[%c0_25, %c0_26, %c0_27] : memref<1x20x256xf32, #tpu.memory_space<vmem>>, vector<1x20x256xf32>
    %81 = vector.shape_cast %80 : vector<1x20x256xf32> to vector<20x256xf32>
    %82 = vector.shape_cast %79 : vector<20x256xf32> to vector<1x20x256xf32>
    tpu.vector_store %arg5[%c0_25, %c0_26, %c0_27], %82 {strides = array<i32>} : memref<1x20x256xf32, #tpu.memory_space<vmem>>, vector<1x20x256xf32>,
    return
  }
  func.func @transform_0(%arg0: i32, %arg1: i32) -> (i32, i32, i32) {
    %c0_i32 = arith.constant 0 : i32
    %c0_i32_0 = arith.constant 0 : i32
    return %arg0, %c0_i32, %arg1 : i32, i32, i32
  }
  func.func @transform_1(%arg0: i32, %arg1: i32) -> (i32, i32) {
    %c0_i32 = arith.constant 0 : i32
    %c0_i32_0 = arith.constant 0 : i32
    %c0_i32_1 = arith.constant 0 : i32
    return %c0_i32, %c0_i32_0 : i32, i32
  }
  func.func @transform_2(%arg0: i32, %arg1: i32) -> (i32, i32) {
    %c0_i32 = arith.constant 0 : i32
    %c0_i32_0 = arith.constant 0 : i32
    %c0_i32_1 = arith.constant 0 : i32
    return %c0_i32, %c0_i32_0 : i32, i32
  }
  func.func @transform_3(%arg0: i32, %arg1: i32) -> (i32, i32, i32) {
    %c0_i32 = arith.constant 0 : i32
    %c0_i32_0 = arith.constant 0 : i32
    return %arg0, %c0_i32, %arg1 : i32, i32, i32
  }
}

</mosaic_0001>

<llo_original>
// kernel: tpu_custom_call.1
$region0: #{tpu_custom_call.1}
  #allocation0 [shape = 'u32[]', space=smem, size = 0x4, offset = 0x4, fixed_abs, tag = 'smem constant byte address 0x4 - core index']
  #allocation1 [shape = 'u32[72,128]{1,0:T(1,128)}', space=vmem, size = 0x9000, scoped, tag = 'internal scratch']
  %s0 = inlined_call_operand.hbm [shape: f32[2,32,256], index: 0, kind: input, shape index: {}]
  %s1 = inlined_call_operand.vmem [shape: f32[20,32], index: 1, kind: input, shape index: {}]
  %s2 = inlined_call_operand.vmem [shape: f32[20,8], index: 2, kind: input, shape index: {}]
  %s3 = inlined_call_operand.vmem [shape: f32[2,20,256], index: 3, kind: output, shape index: {}]
  %s4 = sld [smem:[#allocation0]]
  $region49: #{tpu_custom_call.1} parent=0
    _
  %s6 = ssub.s32 1, %s4
  %s7 = scalar_select 0, %s6, %s4
  $region1: #{tpu_custom_call.1} parent=0
    #allocation2 [shape = 'u8[65536]{0}', space=vmem, size = 0x10000, scoped, tag = 'input window, operand 0']
    #allocation3 [shape = 's32[2]{0}', space=sflag, size = 0x8, scoped, tag = 'scoped memory for tpu_custom_call.1']
    %8 = vsyncpa [#allocation3], 0
    %s9 = scalar_lea.sflag [#allocation3], 1
    %10 = vsyncpa %s9, 0
    loop: start=0, step=1, limit=4
    $region2: #{tpu_custom_call.1} parent=1 // loop_pre_header
      _
    $region3: #{tpu_custom_call.1} parent=1 // loop_header
      %s12 = sphi 0, %s16
      %p13 = scmp.ge.s32.totalorder %s12, 4
      %s19 = sphi 0, %s31
      %s20 = sphi 0, %s27
      %s21 = sphi 0, %s19
      %s22 = sphi 0, %s20
      %s23 = sphi 0, %s21
      %s24 = sphi 0, %s22
      %s36 = sphi 0, %s38
      %s39 = sphi 0, %s36
      %s40 = sphi 0, %s39
      %s56 = sphi 0, %s40
      %s60 = sphi 0, %s60
      %s62 = sphi 0, %s60
      %s63 = sphi 0, %s62
      %s77 = sphi 0, %s63
      %s81 = sphi 0, %s81
      %s83 = sphi 0, %s81
      %s84 = sphi 0, %s83
      %s98 = sphi 0, %s84
      %s106 = sphi 0, %s108
      %s109 = sphi 0, %s106
      %s110 = sphi 0, %s109
      %s126 = sphi 0, %s110
    $region4: #{tpu_custom_call.1} parent=1 // loop_header_branch
      %15 = sbr.rel (%p13) target = $region8
    $region5: #{tpu_custom_call.1} parent=1 // loop_body
      %s17 = ssub.s32 %s12, 1
      %s18 = ssub.s32 %s12, 2
      %s25 = sadd.s32 1, %s20
      %p26 = scmp.ge.s32.totalorder %s25, 1
      %s27 = scalar_select %p26, 0, %s25
      %s28 = sadd.s32 1, %s19
      %s29 = scalar_select %p26, %s28, %s19
      %p30 = scmp.ge.s32.totalorder %s29, 2
      %s31 = scalar_select %p30, 0, %s29
      %s32 = ssub.s32 %s19, %s31
      %s33 = ssub.s32 %s20, %s27
      %s34 = sor.u32 %s32, %s33
      %p35 = scmp.eq.s32.totalorder %s34, 0
      %s37 = sadd.s32 %s36, 1
      %s38 = scalar_select %p35, %s36, %s37
      %p41 = pneg %p35
      %p42 = scmp.eq.s32.totalorder %s12, 1
      %p43 = por %p41, %p42
      %p44 = scmp.ne.s32.totalorder %s36, %s39
      %p45 = scmp.eq.s32.totalorder %s12, 0
      %p46 = por %p44, %p45
      %p47 = scmp.ne.s32.totalorder %s36, %s39
      %p48 = scmp.eq.s32.totalorder %s17, 1
      %p49 = por %p47, %p48
      %p50 = scmp.ne.s32.totalorder %s39, %s40
      %p51 = scmp.eq.s32.totalorder %s17, 0
      %p52 = por %p50, %p51
      %p53 = scmp.ne.s32.totalorder %s39, %s40
      %p54 = scmp.eq.s32.totalorder %s18, 1
      %p55 = por %p53, %p54
      %p57 = scmp.ne.s32.totalorder %s40, %s56
      %p58 = scmp.eq.s32.totalorder %s18, 0
      %p59 = por %p57, %p58
      %s61 = sadd.s32 %s60, 1
      %p64 = scmp.eq.s32.totalorder %s12, 1
      %p65 = scmp.ne.s32.totalorder %s60, %s62
      %p66 = scmp.eq.s32.totalorder %s12, 0
      %p67 = por %p65, %p66
      %p68 = scmp.ne.s32.totalorder %s60, %s62
      %p69 = scmp.eq.s32.totalorder %s17, 1
      %p70 = por %p68, %p69
      %p71 = scmp.ne.s32.totalorder %s62, %s63
      %p72 = scmp.eq.s32.totalorder %s17, 0
      %p73 = por %p71, %p72
      %p74 = scmp.ne.s32.totalorder %s62, %s63
      %p75 = scmp.eq.s32.totalorder %s18, 1
      %p76 = por %p74, %p75
      %p78 = scmp.ne.s32.totalorder %s63, %s77
      %p79 = scmp.eq.s32.totalorder %s18, 0
      %p80 = por %p78, %p79
      %s82 = sadd.s32 %s81, 1
      %p85 = scmp.eq.s32.totalorder %s12, 1
      %p86 = scmp.ne.s32.totalorder %s81, %s83
      %p87 = scmp.eq.s32.totalorder %s12, 0
      %p88 = por %p86, %p87
      %p89 = scmp.ne.s32.totalorder %s81, %s83
      %p90 = scmp.eq.s32.totalorder %s17, 1
      %p91 = por %p89, %p90
      %p92 = scmp.ne.s32.totalorder %s83, %s84
      %p93 = scmp.eq.s32.totalorder %s17, 0
      %p94 = por %p92, %p93
      %p95 = scmp.ne.s32.totalorder %s83, %s84
      %p96 = scmp.eq.s32.totalorder %s18, 1
      %p97 = por %p95, %p96
      %p99 = scmp.ne.s32.totalorder %s84, %s98
      %p100 = scmp.eq.s32.totalorder %s18, 0
      %p101 = por %p99, %p100
      %s102 = ssub.s32 %s19, %s31
      %s103 = ssub.s32 %s20, %s27
      %s104 = sor.u32 %s102, %s103
      %p105 = scmp.eq.s32.totalorder %s104, 0
      %s107 = sadd.s32 %s106, 1
      %s108 = scalar_select %p105, %s106, %s107
      %p111 = pneg %p105
      %p112 = scmp.eq.s32.totalorder %s12, 1
      %p113 = por %p111, %p112
      %p114 = scmp.ne.s32.totalorder %s106, %s109
      %p115 = scmp.eq.s32.totalorder %s12, 0
      %p116 = por %p114, %p115
      %p117 = scmp.ne.s32.totalorder %s106, %s109
      %p118 = scmp.eq.s32.totalorder %s17, 1
      %p119 = por %p117, %p118
      %p120 = scmp.ne.s32.totalorder %s109, %s110
      %p121 = scmp.eq.s32.totalorder %s17, 0
      %p122 = por %p120, %p121
      %p123 = scmp.ne.s32.totalorder %s109, %s110
      %p124 = scmp.eq.s32.totalorder %s18, 1
      %p125 = por %p123, %p124
      %p127 = scmp.ne.s32.totalorder %s110, %s126
      %p128 = scmp.eq.s32.totalorder %s18, 0
      %p129 = por %p127, %p128
      %p130 = scmp.le.s32.totalorder 1, %s12
      %p131 = scmp.lt.s32.totalorder %s12, 3
      %p132 = pnand %p130, %p131
      %p133 = pneg %p132
      // Predicated region
      $region9: #{tpu_custom_call.1} parent=5 // pred_check
        _
      $region10: #{tpu_custom_call.1} parent=5 // pred_check_branch
        %135 = sbr.rel (%p132) target = $region12
      $region11: #{tpu_custom_call.1} parent=5 // pred_region
        %s136 = ssub.s32 %s12, 1
        // Predicated region
        $region13: #{tpu_custom_call.1} parent=11 // pred_check
          %p137 = pneg %p73
        $region14: #{tpu_custom_call.1} parent=11 // pred_check_branch
          %139 = sbr.rel (%p137) target = $region16
        $region15: #{tpu_custom_call.1} parent=11 // pred_region
          _
        $region16: #{tpu_custom_call.1} parent=11 // pred_fallthru
          _
        // Predicated region
        $region17: #{tpu_custom_call.1} parent=11 // pred_check
          %p140 = pneg %p94
        $region18: #{tpu_custom_call.1} parent=11 // pred_check_branch
          %142 = sbr.rel (%p140) target = $region20
        $region19: #{tpu_custom_call.1} parent=11 // pred_region
          _
        $region20: #{tpu_custom_call.1} parent=11 // pred_fallthru
          _
      $region12: #{tpu_custom_call.1} parent=5 // pred_fallthru
        _
      %p143 = scmp.lt.s32.totalorder %s12, 2
      // Predicated region
      $region21: #{tpu_custom_call.1} parent=5 // pred_check
        %p144 = pneg %p143
      $region22: #{tpu_custom_call.1} parent=5 // pred_check_branch
        %146 = sbr.rel (%p144) target = $region24
      $region23: #{tpu_custom_call.1} parent=5 // pred_region
        // Predicated region
        $region25: #{tpu_custom_call.1} parent=23 // pred_check
          %p147 = pneg %p46
        $region26: #{tpu_custom_call.1} parent=23 // pred_check_branch
          %149 = sbr.rel (%p147) target = $region28
        $region27: #{tpu_custom_call.1} parent=23 // pred_region
          %s150 = sand.u32 %s36, 1
          %s151 = scalar_lea.sflag [#allocation3], %s150
          %s152 = sand.u32 %s36, 1
          %s153 = smul.addr %s152, 64
          %s154 = scalar_lea.vmem [#allocation2], %s153
          %s155 = smul.u32 2, %s20
          %157 = vsyncadd %s151, 0
          %s158 = smul.addr %s19, 8
          %s159 = sadd.s32 %s155, %s158
          %s160 = smul.addr %s159, 8
          %s161 = scalar_lea.hbm %s0, %s160
          %s162 = sshll.u32 %s161, 4
          %s163 = int_to_ptr.hbm [resolvable:$true] %s162
          %s164 = sshll.u32 %s154, 4
          %s165 = int_to_ptr.vmem [resolvable:$true] %s164
          %170 = dma.hbm_to_vmem [thread:$0]  %s163, 1024, %s165, %s151, 256, 256, 16
        $region28: #{tpu_custom_call.1} parent=23 // pred_fallthru
          _
      $region24: #{tpu_custom_call.1} parent=5 // pred_fallthru
        _
      %p171 = scmp.le.s32.totalorder 1, %s12
      %p172 = scmp.lt.s32.totalorder %s12, 3
      %p173 = pnand %p171, %p172
      %p174 = pneg %p173
      // Predicated region
      $region29: #{tpu_custom_call.1} parent=5 // pred_check
        _
      $region30: #{tpu_custom_call.1} parent=5 // pred_check_branch
        %176 = sbr.rel (%p173) target = $region32
      $region31: #{tpu_custom_call.1} parent=5 // pred_region
        %s177 = ssub.s32 %s12, 1
        %s178 = sand.u32 %s39, 1
        %s179 = scalar_lea.sflag [#allocation3], %s178
        %s180 = sand.u32 %s39, 1
        %s181 = smul.addr %s180, 64
        %s182 = scalar_lea.vmem [#allocation2], %s181
        // Predicated region
        $region33: #{tpu_custom_call.1} parent=31 // pred_check
          %p183 = pneg %p52
        $region34: #{tpu_custom_call.1} parent=31 // pred_check_branch
          %185 = sbr.rel (%p183) target = $region36
        $region35: #{tpu_custom_call.1} parent=31 // pred_region
          %187 = dma.done %s179, 1024
        $region36: #{tpu_custom_call.1} parent=31 // pred_fallthru
          _
        %s188 = sand.u32 %s39, 1
        %s189 = scalar_lea.sflag [#allocation3], %s188
        %s190 = sand.u32 %s39, 1
        %s191 = smul.addr %s190, 64
        %s192 = scalar_lea.vmem [#allocation2], %s191
        %p193 = pneg %p52
        %p194 = pneg %p49
        %p195 = pneg %p73
        %p196 = pneg %p70
        %p197 = pneg %p94
        %p198 = pneg %p91
        %p199 = pneg %p122
        %p200 = pneg %p119
        %s201 = smul.u32 2, %s22
        %p202 = scmp.lt.s32.totalorder %s21, 1
        %s203 = scalar_select %p202, %s21, 1
        %p204 = scmp.lt.s32.totalorder %s201, 1
        %s205 = scalar_select %p204, %s201, 1
        %s206 = smul.addr %s203, 6
        %s207 = sadd.s32 %s205, %s206
        %s208 = smul.addr %s207, 8
        %s209 = scalar_lea.vmem %s3, %s208
        %s210 = smul.u32 2, %s22
        %s211 = smul.u32 2, %s22
        %p212 = scmp.lt.s32.totalorder %s21, 1
        %s213 = scalar_select %p212, %s21, 1
        %p214 = scmp.lt.s32.totalorder %s211, 1
        %s215 = scalar_select %p214, %s211, 1
        %s216 = smul.addr %s213, 6
        %s217 = sadd.s32 %s215, %s216
        %s218 = smul.addr %s217, 8
        %s219 = scalar_lea.vmem %s3, %s218
        %s220 = smul.u32 2, %s22
        %v221 = vld [vmem:[%s182] sm:$0xff]
        %v222 = vld [vmem:[%s182 + $0x8] sm:$0xff]
        %v223 = vld [vmem:[%s182 + $0x10] sm:$0xff]
        %v224 = vld [vmem:[%s182 + $0x18] sm:$0xff]
        %v225 = vld [vmem:[%s182 + $0x20] sm:$0xff]
        %v226 = vld [vmem:[%s182 + $0x28] sm:$0xff]
        %v227 = vld [vmem:[%s182 + $0x30] sm:$0xff]
        %v228 = vld [vmem:[%s182 + $0x38] sm:$0xff]
        %v229 = vld [vmem:[%s1] sm:$0xff]
        %v230 = vld [vmem:[%s1 + $0x8] sm:$0xff]
        %v231 = vld [vmem:[%s1 + $0x10] sm:$0xf]
        %v232 = vld [vmem:[%s2] sm:$0xff]
        %v233 = vld [vmem:[%s2 + $0x8] sm:$0xff]
        %v234 = vld [vmem:[%s2 + $0x10] sm:$0xf]
        %236 = vset.pattern.permute.xlu0 0
        %237 = vperm.xlu0 %236, %v232
        %v238 = vpop.permute.xlu0 %237
        %241 = vset.pattern.permute.xlu0 0
        %242 = vperm.xlu0 %241, %v233
        %v243 = vpop.permute.xlu0 %242
        %246 = vset.pattern.permute.xlu0 0
        %247 = vperm.xlu0 %246, %v234
        %v248 = vpop.permute.xlu0 %247
        %vm250 = vcmask 261120
        %v252 = vsel %vm250, %v229, 0
        %v255 = vsel %vm250, %v230, 0
        %v258 = vsel %vm250, %v231, 0
        %260 = vmatpush.msra.mxu0 0.0
        %261 = vmatpush.msra.mxu0 0.0
        %262 = vmatpush.msra.mxu0 0.0
        %263 = vmatpush.msra.mxu0 0.0
        %264 = vmatpush.msra.mxu0 0.0
        %265 = vmatpush.msra.mxu0 0.0
        %266 = vmatpush.msra.mxu0 0.0
        %267 = vmatpush.msra.mxu0 0.0
        %268 = vmatpush.msra.mxu0 0.0
        %269 = vmatpush.msra.mxu0 0.0
        %270 = vmatpush.msra.mxu0 0.0
        %271 = vmatpush.msra.mxu0 0.0
        %272 = vmatpush.msra.mxu0 %v227
        %273 = vmatpush.msra.mxu0 %v225
        %274 = vmatpush.msra.mxu0 %v223
        %275 = vmatpush.msra.mxu0 %v221
        %276 = vmatmul.f32.gmra.mxu0 %v252
        %v277 = vpop.f32.mrf.mxu0
        %v278 = vadd.f32 %v238, %v277
        %279 = vmatmul.f32.gmra.mxu0 %v255
        %v280 = vpop.f32.mrf.mxu0
        %v281 = vadd.f32 %v243, %v280
        %282 = vmatmul.f32.gmra.mxu0 %v258
        %v283 = vpop.f32.mrf.mxu0
        %v284 = vadd.f32 %v248, %v283
        %285 = vdwg.mxu0
        %286 = vmatpush.msra.mxu0 0.0
        %287 = vmatpush.msra.mxu0 0.0
        %288 = vmatpush.msra.mxu0 0.0
        %289 = vmatpush.msra.mxu0 0.0
        %290 = vmatpush.msra.mxu0 0.0
        %291 = vmatpush.msra.mxu0 0.0
        %292 = vmatpush.msra.mxu0 0.0
        %293 = vmatpush.msra.mxu0 0.0
        %294 = vmatpush.msra.mxu0 0.0
        %295 = vmatpush.msra.mxu0 0.0
        %296 = vmatpush.msra.mxu0 0.0
        %297 = vmatpush.msra.mxu0 0.0
        %298 = vmatpush.msra.mxu0 %v228
        %299 = vmatpush.msra.mxu0 %v226
        %300 = vmatpush.msra.mxu0 %v224
        %301 = vmatpush.msra.mxu0 %v222
        %302 = vmatmul.f32.gmra.mxu0 %v252
        %v303 = vpop.f32.mrf.mxu0
        %v304 = vadd.f32 %v238, %v303
        %305 = vmatmul.f32.gmra.mxu0 %v255
        %v306 = vpop.f32.mrf.mxu0
        %v307 = vadd.f32 %v243, %v306
        %308 = vmatmul.f32.gmra.mxu0 %v258
        %v309 = vpop.f32.mrf.mxu0
        %v310 = vadd.f32 %v248, %v309
        %311 = vdwg.mxu0
        %vm312 = vcmp.gt.f32.partialorder %v232, 0.0
        %vm313 = vcmp.gt.f32.partialorder %v233, 0.0
        %vm314 = vcmp.gt.f32.partialorder %v234, 0.0
        %v315 = vxor.u32 %v278, 2147483648
        %v316 = vxor.u32 %v304, 2147483648
        %v317 = vxor.u32 %v281, 2147483648
        %v318 = vxor.u32 %v307, 2147483648
        %v319 = vxor.u32 %v284, 2147483648
        %v320 = vxor.u32 %v310, 2147483648
        %v321 = vmul.f32 %v315, 1.442695
        %v322 = vpow.pop %v321
        %v323 = vmul.f32 %v316, 1.442695
        %v324 = vpow.pop %v323
        %v325 = vmul.f32 %v317, 1.442695
        %v326 = vpow.pop %v325
        %v327 = vmul.f32 %v318, 1.442695
        %v328 = vpow.pop %v327
        %v329 = vmul.f32 %v319, 1.442695
        %v330 = vpow.pop %v329
        %v331 = vmul.f32 %v320, 1.442695
        %v332 = vpow.pop %v331
        %v333 = vadd.f32 %v322, 1.0
        %v334 = vadd.f32 %v324, 1.0
        %v335 = vadd.f32 %v326, 1.0
        %v336 = vadd.f32 %v328, 1.0
        %v337 = vadd.f32 %v330, 1.0
        %v338 = vadd.f32 %v332, 1.0
        %v339 = vrcp.pop %v333
        %v340 = vmul.f32 %v333, %v339
        %v341 = vsub.f32 1.0, %v340
        %v342 = vmul.f32 %v339, %v341
        %v343 = vadd.f32 %v339, %v342
        %vm344 = vweird.f32 %v333
        %vm345 = vweird.f32 %v339
        %vm346 = vmor %vm344, %vm345
        %v347 = vsel %vm346, %v339, %v343
        %v348 = vand.u32 2147483647, %v333
        %vm349 = vcmp.eq.f32.partialorder %v348, 8.507059e+37
        %v350 = vand.u32 %v333, 2147483648
        %v351 = vor.u32 1.1754944e-38, %v350
        %v352 = vsel %vm349, %v351, %v347
        %v353 = vmul.f32 1.0, %v352
        %v354 = vrcp.pop %v334
        %v355 = vmul.f32 %v334, %v354
        %v356 = vsub.f32 1.0, %v355
        %v357 = vmul.f32 %v354, %v356
        %v358 = vadd.f32 %v354, %v357
        %vm359 = vweird.f32 %v334
        %vm360 = vweird.f32 %v354
        %vm361 = vmor %vm359, %vm360
        %v362 = vsel %vm361, %v354, %v358
        %v363 = vand.u32 2147483647, %v334
        %vm364 = vcmp.eq.f32.partialorder %v363, 8.507059e+37
        %v365 = vand.u32 %v334, 2147483648
        %v366 = vor.u32 1.1754944e-38, %v365
        %v367 = vsel %vm364, %v366, %v362
        %v368 = vmul.f32 1.0, %v367
        %v369 = vrcp.pop %v335
        %v370 = vmul.f32 %v335, %v369
        %v371 = vsub.f32 1.0, %v370
        %v372 = vmul.f32 %v369, %v371
        %v373 = vadd.f32 %v369, %v372
        %vm374 = vweird.f32 %v335
        %vm375 = vweird.f32 %v369
        %vm376 = vmor %vm374, %vm375
        %v377 = vsel %vm376, %v369, %v373
        %v378 = vand.u32 2147483647, %v335
        %vm379 = vcmp.eq.f32.partialorder %v378, 8.507059e+37
        %v380 = vand.u32 %v335, 2147483648
        %v381 = vor.u32 1.1754944e-38, %v380
        %v382 = vsel %vm379, %v381, %v377
        %v383 = vmul.f32 1.0, %v382
        %v384 = vrcp.pop %v336
        %v385 = vmul.f32 %v336, %v384
        %v386 = vsub.f32 1.0, %v385
        %v387 = vmul.f32 %v384, %v386
        %v388 = vadd.f32 %v384, %v387
        %vm389 = vweird.f32 %v336
        %vm390 = vweird.f32 %v384
        %vm391 = vmor %vm389, %vm390
        %v392 = vsel %vm391, %v384, %v388
        %v393 = vand.u32 2147483647, %v336
        %vm394 = vcmp.eq.f32.partialorder %v393, 8.507059e+37
        %v395 = vand.u32 %v336, 2147483648
        %v396 = vor.u32 1.1754944e-38, %v395
        %v397 = vsel %vm394, %v396, %v392
        %v398 = vmul.f32 1.0, %v397
        %v399 = vrcp.pop %v337
        %v400 = vmul.f32 %v337, %v399
        %v401 = vsub.f32 1.0, %v400
        %v402 = vmul.f32 %v399, %v401
        %v403 = vadd.f32 %v399, %v402
        %vm404 = vweird.f32 %v337
        %vm405 = vweird.f32 %v399
        %vm406 = vmor %vm404, %vm405
        %v407 = vsel %vm406, %v399, %v403
        %v408 = vand.u32 2147483647, %v337
        %vm409 = vcmp.eq.f32.partialorder %v408, 8.507059e+37
        %v410 = vand.u32 %v337, 2147483648
        %v411 = vor.u32 1.1754944e-38, %v410
        %v412 = vsel %vm409, %v411, %v407
        %v413 = vmul.f32 1.0, %v412
        %v414 = vrcp.pop %v338
        %v415 = vmul.f32 %v338, %v414
        %v416 = vsub.f32 1.0, %v415
        %v417 = vmul.f32 %v414, %v416
        %v418 = vadd.f32 %v414, %v417
        %vm419 = vweird.f32 %v338
        %vm420 = vweird.f32 %v414
        %vm421 = vmor %vm419, %vm420
        %v422 = vsel %vm421, %v414, %v418
        %v423 = vand.u32 2147483647, %v338
        %vm424 = vcmp.eq.f32.partialorder %v423, 8.507059e+37
        %v425 = vand.u32 %v338, 2147483648
        %v426 = vor.u32 1.1754944e-38, %v425
        %v427 = vsel %vm424, %v426, %v422
        %v428 = vmul.f32 1.0, %v427
        %v429 = vsel %vm312, 1, 0
        %v430 = vsel %vm313, 1, 0
        %v431 = vsel %vm314, 1, 0
        %432 = vset.pattern.permute.xlu0 3
        %433 = vperm.xlu0 %432, %v429
        %v434 = vpop.permute.xlu0 %433
        %435 = vset.pattern.permute.xlu0 3
        %436 = vperm.xlu0 %435, %v430
        %v437 = vpop.permute.xlu0 %436
        %438 = vset.pattern.permute.xlu0 3
        %439 = vperm.xlu0 %438, %v431
        %v440 = vpop.permute.xlu0 %439
        %vm441 = vcmp.eq.s32.totalorder %v434, 1
        %vm442 = vcmp.eq.s32.totalorder %v437, 1
        %vm443 = vcmp.eq.s32.totalorder %v440, 1
        %v444 = vsel %vm441, %v353, %v278
        %v445 = vsel %vm441, %v368, %v304
        %v446 = vsel %vm442, %v383, %v281
        %v447 = vsel %vm442, %v398, %v307
        %v448 = vsel %vm443, %v413, %v284
        %v449 = vsel %vm443, %v428, %v310
        %v450 = vmax.f32 %v278, 0.0
        %v451 = vmax.f32 %v304, 0.0
        %v452 = vmax.f32 %v281, 0.0
        %v453 = vmax.f32 %v307, 0.0
        %v454 = vmax.f32 %v284, 0.0
        %v455 = vmax.f32 %v310, 0.0
        %v456 = vsub.f32 0.0, %v278
        %v457 = vsub.f32 0.0, %v304
        %v458 = vsub.f32 0.0, %v281
        %v459 = vsub.f32 0.0, %v307
        %v460 = vsub.f32 0.0, %v284
        %v461 = vsub.f32 0.0, %v310
        %vm462 = vcmp.ne.f32.partialorder %v456, %v456
        %vm463 = vcmp.ne.f32.partialorder %v457, %v457
        %vm464 = vcmp.ne.f32.partialorder %v458, %v458
        %vm465 = vcmp.ne.f32.partialorder %v459, %v459
        %vm466 = vcmp.ne.f32.partialorder %v460, %v460
        %vm467 = vcmp.ne.f32.partialorder %v461, %v461
        %v468 = vadd.f32 %v278, 0.0
        %v469 = vadd.f32 %v304, 0.0
        %v470 = vadd.f32 %v281, 0.0
        %v471 = vadd.f32 %v307, 0.0
        %v472 = vadd.f32 %v284, 0.0
        %v473 = vadd.f32 %v310, 0.0
        %v474 = vand.u32 2147483647, %v456
        %v475 = vand.u32 2147483647, %v457
        %v476 = vand.u32 2147483647, %v458
        %v477 = vand.u32 2147483647, %v459
        %v478 = vand.u32 2147483647, %v460
        %v479 = vand.u32 2147483647, %v461
        %v480 = vsub.f32 0.0, %v474
        %v481 = vsub.f32 0.0, %v475
        %v482 = vsub.f32 0.0, %v476
        %v483 = vsub.f32 0.0, %v477
        %v484 = vsub.f32 0.0, %v478
        %v485 = vsub.f32 0.0, %v479
        %v486 = vmul.f32 %v480, 1.442695
        %v487 = vpow.pop %v486
        %v488 = vmul.f32 %v481, 1.442695
        %v489 = vpow.pop %v488
        %v490 = vmul.f32 %v482, 1.442695
        %v491 = vpow.pop %v490
        %v492 = vmul.f32 %v483, 1.442695
        %v493 = vpow.pop %v492
        %v494 = vmul.f32 %v484, 1.442695
        %v495 = vpow.pop %v494
        %v496 = vmul.f32 %v485, 1.442695
        %v497 = vpow.pop %v496
        %v498 = vadd.f32 %v487, 1.0
        %v499 = vlog2.pop %v498
        %v500 = vmul.f32 %v499, 0.6931472
        %v501 = vmul.f32 -0.5, %v487
        %v502 = vadd.f32 %v501, 1.0
        %v503 = vmul.f32 %v502, %v487
        %v504 = vand.u32 2147483647, %v487
        %vm505 = vcmp.lt.f32.partialorder %v504, 0.0004427343
        %v506 = vsel %vm505, %v503, %v500
        %v507 = vadd.f32 %v489, 1.0
        %v508 = vlog2.pop %v507
        %v509 = vmul.f32 %v508, 0.6931472
        %v510 = vmul.f32 -0.5, %v489
        %v511 = vadd.f32 %v510, 1.0
        %v512 = vmul.f32 %v511, %v489
        %v513 = vand.u32 2147483647, %v489
        %vm514 = vcmp.lt.f32.partialorder %v513, 0.0004427343
        %v515 = vsel %vm514, %v512, %v509
        %v516 = vadd.f32 %v491, 1.0
        %v517 = vlog2.pop %v516
        %v518 = vmul.f32 %v517, 0.6931472
        %v519 = vmul.f32 -0.5, %v491
        %v520 = vadd.f32 %v519, 1.0
        %v521 = vmul.f32 %v520, %v491
        %v522 = vand.u32 2147483647, %v491
        %vm523 = vcmp.lt.f32.partialorder %v522, 0.0004427343
        %v524 = vsel %vm523, %v521, %v518
        %v525 = vadd.f32 %v493, 1.0
        %v526 = vlog2.pop %v525
        %v527 = vmul.f32 %v526, 0.6931472
        %v528 = vmul.f32 -0.5, %v493
        %v529 = vadd.f32 %v528, 1.0
        %v530 = vmul.f32 %v529, %v493
        %v531 = vand.u32 2147483647, %v493
        %vm532 = vcmp.lt.f32.partialorder %v531, 0.0004427343
        %v533 = vsel %vm532, %v530, %v527
        %v534 = vadd.f32 %v495, 1.0
        %v535 = vlog2.pop %v534
        %v536 = vmul.f32 %v535, 0.6931472
        %v537 = vmul.f32 -0.5, %v495
        %v538 = vadd.f32 %v537, 1.0
        %v539 = vmul.f32 %v538, %v495
        %v540 = vand.u32 2147483647, %v495
        %vm541 = vcmp.lt.f32.partialorder %v540, 0.0004427343
        %v542 = vsel %vm541, %v539, %v536
        %v543 = vadd.f32 %v497, 1.0
        %v544 = vlog2.pop %v543
        %v545 = vmul.f32 %v544, 0.6931472
        %v546 = vmul.f32 -0.5, %v497
        %v547 = vadd.f32 %v546, 1.0
        %v548 = vmul.f32 %v547, %v497
        %v549 = vand.u32 2147483647, %v497
        %vm550 = vcmp.lt.f32.partialorder %v549, 0.0004427343
        %v551 = vsel %vm550, %v548, %v545
        %v552 = vadd.f32 %v450, %v506
        %v553 = vadd.f32 %v451, %v515
        %v554 = vadd.f32 %v452, %v524
        %v555 = vadd.f32 %v453, %v533
        %v556 = vadd.f32 %v454, %v542
        %v557 = vadd.f32 %v455, %v551
        %v558 = vsel %vm462, %v468, %v552
        %v559 = vsel %vm463, %v469, %v553
        %v560 = vsel %vm464, %v470, %v554
        %v561 = vsel %vm465, %v471, %v555
        %v562 = vsel %vm466, %v472, %v556
        %v563 = vsel %vm467, %v473, %v557
        %564 = vset.pattern.permute.xlu0 4
        %565 = vperm.xlu0 %564, %v429
        %v566 = vpop.permute.xlu0 %565
        %567 = vset.pattern.permute.xlu0 4
        %568 = vperm.xlu0 %567, %v430
        %v569 = vpop.permute.xlu0 %568
        %570 = vset.pattern.permute.xlu0 4
        %571 = vperm.xlu0 %570, %v431
        %v572 = vpop.permute.xlu0 %571
        %vm573 = vcmp.eq.s32.totalorder %v566, 1
        %vm574 = vcmp.eq.s32.totalorder %v569, 1
        %vm575 = vcmp.eq.s32.totalorder %v572, 1
        %v576 = vsel %vm573, %v558, %v444
        %v577 = vsel %vm573, %v559, %v445
        %v578 = vsel %vm574, %v560, %v446
        %v579 = vsel %vm574, %v561, %v447
        %v580 = vsel %vm575, %v562, %v448
        %v581 = vsel %vm575, %v563, %v449
        %s582 = smul.u32 %s22, 256
        %s583 = scvt.s32.f32 %s582
        %v584 = vlaneseq
        %v585 = vand.u32 %v584, 127
        %v586 = vadd.s32 %v585, 128
        %v587 = vcvt.s32.f32 %v585
        %v588 = vcvt.s32.f32 %v586
        %v589 = vstv %s583
        %v590 = vadd.f32 %v589, %v587
        %v591 = vadd.f32 %v589, %v588
        %v592 = vmul.f32 %v590, 0.0625
        %v593 = vmul.f32 %v591, 0.0625
        %v594 = vfloor.f32 %v592
        %v595 = vfloor.f32 %v593
        %v596 = vmul.f32 %v594, 16.0
        %v597 = vmul.f32 %v595, 16.0
        %v598 = vsub.f32 %v590, %v596
        %v599 = vsub.f32 %v591, %v597
        %vm600 = vcmp.lt.f32.partialorder %v598, 0.0
        %vm601 = vcmp.lt.f32.partialorder %v599, 0.0
        %v602 = vsub.f32 %v594, 1.0
        %v603 = vsub.f32 %v595, 1.0
        %v604 = vsel %vm600, %v602, %v594
        %v605 = vsel %vm601, %v603, %v595
        %v606 = vadd.f32 %v598, 16.0
        %v607 = vadd.f32 %v599, 16.0
        %v608 = vsel %vm600, %v606, %v598
        %v609 = vsel %vm601, %v607, %v599
        %vm610 = vcmp.ge.f32.partialorder %v608, 16.0
        %vm611 = vcmp.ge.f32.partialorder %v609, 16.0
        %v612 = vadd.f32 %v604, 1.0
        %v613 = vadd.f32 %v605, 1.0
        %v614 = vsel %vm610, %v612, %v604
        %v615 = vsel %vm611, %v613, %v605
        %v616 = vsub.f32 %v608, 16.0
        %v617 = vsub.f32 %v609, 16.0
        %v618 = vsel %vm610, %v616, %v608
        %v619 = vsel %vm611, %v617, %v609
        %620 = vset.pattern.permute.xlu0 1
        %621 = vperm.xlu0 %620, %v232
        %v622 = vpop.permute.xlu0 %621
        %624 = vset.pattern.permute.xlu0 1
        %625 = vperm.xlu0 %624, %v233
        %v626 = vpop.permute.xlu0 %625
        %628 = vset.pattern.permute.xlu0 1
        %629 = vperm.xlu0 %628, %v234
        %v630 = vpop.permute.xlu0 %629
        %v632 = vmul.f32 %v622, %v618
        %v633 = vmul.f32 %v622, %v619
        %v634 = vmul.f32 %v626, %v618
        %v635 = vmul.f32 %v626, %v619
        %v636 = vmul.f32 %v630, %v618
        %v637 = vmul.f32 %v630, %v619
        %v638 = vadd.f32 %v576, %v632
        %v639 = vadd.f32 %v577, %v633
        %v640 = vadd.f32 %v578, %v634
        %v641 = vadd.f32 %v579, %v635
        %v642 = vadd.f32 %v580, %v636
        %v643 = vadd.f32 %v581, %v637
        %644 = vset.pattern.permute.xlu0 2
        %645 = vperm.xlu0 %644, %v232
        %v646 = vpop.permute.xlu0 %645
        %648 = vset.pattern.permute.xlu0 2
        %649 = vperm.xlu0 %648, %v233
        %v650 = vpop.permute.xlu0 %649
        %652 = vset.pattern.permute.xlu0 2
        %653 = vperm.xlu0 %652, %v234
        %v654 = vpop.permute.xlu0 %653
        %v656 = vmul.f32 %v646, %v614
        %v657 = vmul.f32 %v646, %v615
        %v658 = vmul.f32 %v650, %v614
        %v659 = vmul.f32 %v650, %v615
        %v660 = vmul.f32 %v654, %v614
        %v661 = vmul.f32 %v654, %v615
        %v662 = vadd.f32 %v638, %v656
        %v663 = vadd.f32 %v639, %v657
        %v664 = vadd.f32 %v640, %v658
        %v665 = vadd.f32 %v641, %v659
        %v666 = vadd.f32 %v642, %v660
        %v667 = vadd.f32 %v643, %v661
        %668 = vst [vmem:[%s219] sm:$0xff] %v662
        %669 = vst [vmem:[%s219 + $0x8] sm:$0xff] %v663
        %670 = vst [vmem:[%s219 + $0x10] sm:$0xff] %v664
        %671 = vst [vmem:[%s219 + $0x18] sm:$0xff] %v665
        %672 = vst [vmem:[%s219 + $0x20] sm:$0xf] %v666
        %673 = vst [vmem:[%s219 + $0x28] sm:$0xf] %v667
        %s674 = smul.u32 2, %s22
        %p675 = scmp.lt.s32.totalorder %s21, 1
        %s676 = scalar_select %p675, %s21, 1
        %p677 = scmp.lt.s32.totalorder %s674, 1
        %s678 = scalar_select %p677, %s674, 1
        %s679 = smul.addr %s676, 6
        %s680 = sadd.s32 %s678, %s679
        %s681 = smul.addr %s680, 8
        %s682 = scalar_lea.vmem %s3, %s681
        // Predicated region
        $region37: #{tpu_custom_call.1} parent=31 // pred_check
          %p683 = pneg %p119
        $region38: #{tpu_custom_call.1} parent=31 // pred_check_branch
          %685 = sbr.rel (%p683) target = $region40
        $region39: #{tpu_custom_call.1} parent=31 // pred_region
          %s686 = smul.u32 2, %s22
        $region40: #{tpu_custom_call.1} parent=31 // pred_fallthru
          _
      $region32: #{tpu_custom_call.1} parent=5 // pred_fallthru
        _
      %p687 = scmp.le.s32.totalorder 2, %s12
      // Predicated region
      $region41: #{tpu_custom_call.1} parent=5 // pred_check
        %p688 = pneg %p687
      $region42: #{tpu_custom_call.1} parent=5 // pred_check_branch
        %690 = sbr.rel (%p688) target = $region44
      $region43: #{tpu_custom_call.1} parent=5 // pred_region
        %s691 = ssub.s32 %s12, 2
        // Predicated region
        $region45: #{tpu_custom_call.1} parent=43 // pred_check
          %p692 = pneg %p125
        $region46: #{tpu_custom_call.1} parent=43 // pred_check_branch
          %694 = sbr.rel (%p692) target = $region48
        $region47: #{tpu_custom_call.1} parent=43 // pred_region
          %s695 = smul.u32 2, %s24
          %p696 = scmp.lt.s32.totalorder %s23, 1
          %s697 = scalar_select %p696, %s23, 1
          %p698 = scmp.lt.s32.totalorder %s695, 1
          %s699 = scalar_select %p698, %s695, 1
          %s700 = smul.addr %s697, 6
          %s701 = sadd.s32 %s699, %s700
          %s702 = smul.addr %s701, 8
          %s703 = scalar_lea.vmem %s3, %s702
        $region48: #{tpu_custom_call.1} parent=43 // pred_fallthru
          _
      $region44: #{tpu_custom_call.1} parent=5 // pred_fallthru
        _
    $region6: #{tpu_custom_call.1} parent=1 // loop_footer
      %s16 = sadd.s32 1, %s12
    $region7: #{tpu_custom_call.1} parent=1 // loop_footer_branch
      %11 = sbr.rel target = $region3
    $region8: #{tpu_custom_call.1} parent=1 // loop_exit
      _
    %704 = vsyncpa [#allocation3], 1
    %s705 = scalar_lea.sflag [#allocation3], 1
    %706 = vsyncpa %s705, 1

</llo_original>
